<compile_context>
chip_gen: v7x
topology: tpu7x:2x2x1
jax: 0.10.0
libtpu: 0.0.40
codegen_flags: <defaults>
</compile_context>

<pallas_src>
import jax
import jax.numpy as jnp
from jax.experimental import pallas as pl
from jax.experimental.pallas import tpu as pltpu

# ---------------- model dimensions (small, synthetic) ----------------
N_BATCH = 2      # batch
T_SEQ   = 16     # trajectory length
C_IN    = 4      # input channels per time step
HID     = 32     # conv hidden channels
FEAT    = 32     # feature embedding dim (f)
T_QUERY = 8      # number of query times t
K_BASIS = 8      # subspace basis dimension (B)

R_ROWS = N_BATCH * T_SEQ       # 32 rows, (n, t) row-major
Q_ROWS = N_BATCH * T_QUERY     # 16 query rows, (n, q) row-major
DYN_W  = max(C_IN, N_BATCH + 2)

SLAB_LANES = 128
OUT_LANES  = 128


def _r8(n):
    return ((n + 7) // 8) * 8


# ---------------- packed parameter-slab layout (rows of a (SLAB_ROWS,128) slab) ----
ROW_W1    = 0                                # (3*C_IN, HID) fused conv1 weight
ROW_W2    = ROW_W1 + _r8(3 * C_IN)           # (3*HID, HID)  fused conv2 weight
ROW_WL    = ROW_W2 + _r8(3 * HID)            # (HID, FEAT)   feature linear
ROW_WF    = ROW_WL + _r8(HID)                # (FEAT, HID)   subspace linear
ROW_WO    = ROW_WF + _r8(FEAT)               # (HID, 128)    output linear, lane-padded
ROW_VEC   = ROW_WO + _r8(HID)                # 8 rows of bias/row vectors
ROW_POOL  = ROW_VEC + 8                      # (N, R)   mean-over-T pooling matrix
ROW_SPREV = ROW_POOL + _r8(N_BATCH)          # (R, R)   one-step "previous t" shift
ROW_SNEXT = ROW_SPREV + _r8(R_ROWS)          # (R, R)   one-step "next t" shift
SLAB_ROWS = ROW_SNEXT + _r8(R_ROWS)          # 288


def _vmem():
    return pl.BlockSpec(memory_space=pltpu.MemorySpace.VMEM)


# ---------------- single fused Pallas kernel ----------------
def _fused_kernel(dyn_ref, slab_ref, out_ref):
    R, Q = R_ROWS, Q_ROWS

    # dynamic input slab: rows [0:R) = x (R, C_IN), rows [R:R+Q) = query design
    # matrix [one-hot(n) | t | 1]  (Q, N+2)
    x2 = dyn_ref[0:R, 0:C_IN]                               # (R, C_IN)
    qmat = dyn_ref[R:R + Q, 0:N_BATCH + 2]                  # (Q, N+2)

    # static, zero-cost views into the single resident parameter slab
    s_prev = slab_ref[ROW_SPREV:ROW_SPREV + R, 0:R]         # (R, R)
    s_next = slab_ref[ROW_SNEXT:ROW_SNEXT + R, 0:R]         # (R, R)
    w1f = slab_ref[ROW_W1:ROW_W1 + 3 * C_IN, 0:HID]         # (3*C_IN, HID)
    w2f = slab_ref[ROW_W2:ROW_W2 + 3 * HID, 0:HID]          # (3*HID, HID)
    wl = slab_ref[ROW_WL:ROW_WL + HID, 0:FEAT]              # (HID, FEAT)
    wf = slab_ref[ROW_WF:ROW_WF + FEAT, 0:HID]              # (FEAT, HID)
    wo_pad = slab_ref[ROW_WO:ROW_WO + HID, :]               # (HID, 128) lane-padded
    b1 = slab_ref[ROW_VEC + 0:ROW_VEC + 1, 0:HID]
    b2 = slab_ref[ROW_VEC + 1:ROW_VEC + 2, 0:HID]
    bl = slab_ref[ROW_VEC + 2:ROW_VEC + 3, 0:FEAT]
    bf = slab_ref[ROW_VEC + 3:ROW_VEC + 4, 0:HID]
    wtbt = slab_ref[ROW_VEC + 4:ROW_VEC + 6, 0:HID]         # rows: [wt ; bt]
    bo_pad = slab_ref[ROW_VEC + 6:ROW_VEC + 7, :]           # (1, 128) lane-padded
    pool = slab_ref[ROW_POOL:ROW_POOL + N_BATCH, 0:R]       # (N, R)

    def conv3_relu(h, wfused, b):
        # Conv1d(k=3, pad=1) over T.  Time shifts via constant MXU matmuls
        # (boundary rows already zeroed inside S_prev/S_next), then all three
        # taps fused into a single (R, 3C) @ (3C, HID) MXU matmul.
        h_prev = jnp.dot(s_prev, h, preferred_element_type=jnp.float32)
        h_next = jnp.dot(s_next, h, preferred_element_type=jnp.float32)
        hin = jnp.concatenate([h_prev, h, h_next], axis=1)              # (R, 3C)
        y = jnp.dot(hin, wfused, preferred_element_type=jnp.float32) + b
        return jnp.maximum(y, 0.0)

    # FeatureExtractor: two conv+ReLU layers, all resident in VMEM/vregs.
    h1 = conv3_relu(x2, w1f, b1)                                        # (R, HID)
    h2 = conv3_relu(h1, w2f, b2)                                        # (R, HID)

    # mean over T folded into an MXU dot with the constant pooling matrix,
    # followed by the feature head Linear(HID, FEAT).
    fm = jnp.dot(pool, h2, preferred_element_type=jnp.float32)          # (N, HID)
    f = jnp.dot(fm, wl, preferred_element_type=jnp.float32) + bl        # (N, FEAT)

    # SubspaceEstimator:  hf[n] + t*wt + bt  as ONE matmul
    #   qmat = [one-hot(n) | t | 1]   (Q, N+2)
    #   stk  = [hf ; wt ; bt]         (N+2, HID)
    hf = jnp.dot(f, wf, preferred_element_type=jnp.float32) + bf        # (N, HID)
    stk = jnp.concatenate([hf, wtbt], axis=0)                           # (N+2, HID)
    hq = jnp.maximum(
        jnp.dot(qmat, stk, preferred_element_type=jnp.float32), 0.0)    # (Q, HID)

    # lane-dense output: wo/bo are 128-lane padded, so bflat_full is (Q, 128)
    # with the real basis in lanes [0:K) and zeros elsewhere.
    bflat_full = (jnp.dot(hq, wo_pad, preferred_element_type=jnp.float32)
                  + bo_pad)                                             # (Q, 128)
    out_ref[...] = bflat_full                                           # one full store
    # stash f in spare lanes [K : K+FEAT) of the first N rows
    out_ref[0:N_BATCH, K_BASIS:K_BASIS + FEAT] = f


# ---------------- forward pass (mirrors TrajectoryEmbeddingModel.forward) ----------
_FLOPS = (2 * R_ROWS * R_ROWS * C_IN * 2            # conv1 shift matmuls
          + 2 * R_ROWS * 3 * C_IN * HID             # conv1 fused tap matmul
          + 2 * R_ROWS * R_ROWS * HID * 2           # conv2 shift matmuls
          + 2 * R_ROWS * 3 * HID * HID              # conv2 fused tap matmul
          + 2 * N_BATCH * R_ROWS * HID              # mean-pool matmul
          + 2 * N_BATCH * HID * FEAT                # feature linear
          + 2 * N_BATCH * FEAT * HID                # subspace linear
          + 2 * Q_ROWS * (N_BATCH + 2) * HID        # fused rank-1 matmul
          + 2 * Q_ROWS * HID * OUT_LANES)           # lane-padded output matmul
_BYTES = 4 * ((R_ROWS + Q_ROWS) * DYN_W + SLAB_ROWS * SLAB_LANES + Q_ROWS * OUT_LANES)


def trajectory_embedding_model(x, t, slab):
    # x: (N, T, C_IN), t: (N, T_QUERY), slab: packed params (SLAB_ROWS, 128)
    N, T, C = x.shape
    Tq = t.shape[1]
    R, Q = N * T, N * Tq

    # x.permute(0, 2, 1) in the original just selects the conv axis (T); here
    # the conv runs over T with channels last, so only flatten (n, t) row-major.
    x2 = x.reshape(R, C)

    # query design matrix [one-hot(n) | t | 1] -> fuses hf-gather + t*wt + bt
    rep = jnp.repeat(jnp.eye(N, dtype=jnp.float32), Tq, axis=0)          # (Q, N)
    qmat = jnp.concatenate(
        [rep, t.reshape(Q, 1).astype(jnp.float32), jnp.ones((Q, 1), jnp.float32)],
        axis=1)                                                          # (Q, N+2)

    # pack the two runtime pieces into a single small input slab (1 DMA)
    dyn = jnp.zeros((R + Q, DYN_W), jnp.float32)
    dyn = dyn.at[:R, :C].set(x2)
    dyn = dyn.at[R:, :N + 2].set(qmat)

    out = pl.pallas_call(
        _fused_kernel,
        out_shape=jax.ShapeDtypeStruct((Q_ROWS, OUT_LANES), jnp.float32),
        in_specs=[_vmem(), _vmem()],
        out_specs=_vmem(),
        cost_estimate=pl.CostEstimate(
            flops=_FLOPS, transcendentals=0, bytes_accessed=_BYTES),
    )(dyn, slab)

    f = out[:N, K_BASIS:K_BASIS + FEAT]                                  # (N, FEAT)
    B = out[:, :K_BASIS].reshape(N, Tq, K_BASIS)                         # (N, Tq, K)
    return f, B


# ---------------- parameters (deterministic, synthetic) ----------------
def init_params(key):
    ks = jax.random.split(key, 12)
    s = 0.1

    def nrm(k, shape):
        return (s * jax.random.normal(k, shape)).astype(jnp.float32)

    return {
        # FeatureExtractor: Conv1d(C_IN, HID, 3, pad=1) -> ReLU ->
        #                   Conv1d(HID, HID, 3, pad=1) -> ReLU ->
        #                   mean over T -> Linear(HID, FEAT)
        # conv weights as (3 taps, C_in, C_out): tap0=x[t-1], tap1=x[t], tap2=x[t+1]
        "w1": nrm(ks[0], (3, C_IN, HID)),  "b1": nrm(ks[1], (1, HID)),
        "w2": nrm(ks[2], (3, HID, HID)),   "b2": nrm(ks[3], (1, HID)),
        "wl": nrm(ks[4], (HID, FEAT)),     "bl": nrm(ks[5], (1, FEAT)),
        # SubspaceEstimator: h = ReLU(f@Wf + bf + t*wt + bt); B = h@Wo + bo
        "wf": nrm(ks[6], (FEAT, HID)),     "bf": nrm(ks[7], (1, HID)),
        "wt": nrm(ks[8], (1, HID)),        "bt": nrm(ks[9], (1, HID)),
        "wo": nrm(ks[10], (HID, K_BASIS)), "bo": nrm(ks[11], (1, K_BASIS)),
    }


def pack_params(p):
    """Pack all params + constant matrices into one lane-padded f32 slab (done once)."""
    R = R_ROWS
    slab = jnp.zeros((SLAB_ROWS, SLAB_LANES), jnp.float32)
    slab = slab.at[ROW_W1:ROW_W1 + 3 * C_IN, :HID].set(p["w1"].reshape(3 * C_IN, HID))
    slab = slab.at[ROW_W2:ROW_W2 + 3 * HID, :HID].set(p["w2"].reshape(3 * HID, HID))
    slab = slab.at[ROW_WL:ROW_WL + HID, :FEAT].set(p["wl"])
    slab = slab.at[ROW_WF:ROW_WF + FEAT, :HID].set(p["wf"])
    # wo / bo left zero in lanes [K:128) -> kernel output comes out lane-dense
    slab = slab.at[ROW_WO:ROW_WO + HID, :K_BASIS].set(p["wo"])
    slab = slab.at[ROW_VEC + 0, :HID].set(p["b1"][0])
    slab = slab.at[ROW_VEC + 1, :HID].set(p["b2"][0])
    slab = slab.at[ROW_VEC + 2, :FEAT].set(p["bl"][0])
    slab = slab.at[ROW_VEC + 3, :HID].set(p["bf"][0])
    slab = slab.at[ROW_VEC + 4, :HID].set(p["wt"][0])
    slab = slab.at[ROW_VEC + 5, :HID].set(p["bt"][0])
    slab = slab.at[ROW_VEC + 6, :K_BASIS].set(p["bo"][0])
    # mean-over-T pooling matrix (N, R) for the (n, t) row-major flatten
    pool = jnp.repeat(jnp.eye(N_BATCH, dtype=jnp.float32), T_SEQ, axis=1) / T_SEQ
    slab = slab.at[ROW_POOL:ROW_POOL + N_BATCH, :R].set(pool)
    # one-step time-shift matrices with trajectory-boundary rows zeroed
    ii = jnp.arange(R)[:, None]
    jj = jnp.arange(R)[None, :]
    s_prev = ((jj == ii - 1) & (ii % T_SEQ != 0)).astype(jnp.float32)
    s_next = ((jj == ii + 1) & (ii % T_SEQ != T_SEQ - 1)).astype(jnp.float32)
    slab = slab.at[ROW_SPREV:ROW_SPREV + R, :R].set(s_prev)
    slab = slab.at[ROW_SNEXT:ROW_SNEXT + R, :R].set(s_next)
    return slab


# ---------------- pure-JAX reference for a correctness check ----------------
def reference_model(x, t, p):
    # x: (N, T, C_IN)
    def conv_relu(xin, w, b):
        xp = jnp.pad(xin, ((0, 0), (1, 1), (0, 0)))
        y = xp[:, :-2] @ w[0] + xp[:, 1:-1] @ w[1] + xp[:, 2:] @ w[2] + b
        return jnp.maximum(y, 0.0)

    h1 = conv_relu(x, p["w1"], p["b1"])          # (N, T, HID)
    h2 = conv_relu(h1, p["w2"], p["b2"])         # (N, T, HID)
    f = jnp.mean(h2, axis=1) @ p["wl"] + p["bl"]                      # (N, FEAT)
    hf = f @ p["wf"] + p["bf"]                                        # (N, HID)
    h = jnp.maximum(hf[:, None, :] + t[:, :, None] * p["wt"] + p["bt"], 0.0)
    B = h @ p["wo"] + p["bo"]                                         # (N, Tq, K)
    return f, B


if __name__ == "__main__":
    key = jax.random.PRNGKey(0)
    kx, kt = jax.random.split(key)
    x = jax.random.normal(kx, (N_BATCH, T_SEQ, C_IN), dtype=jnp.float32)
    t = jax.random.normal(kt, (N_BATCH, T_QUERY), dtype=jnp.float32)

    params = init_params(jax.random.PRNGKey(42))
    slab = pack_params(params)                   # packed once, outside jit

    fwd = jax.jit(trajectory_embedding_model)
    f, B = fwd(x, t, slab)
    jax.block_until_ready((f, B))

    f_ref, B_ref = reference_model(x, t, params)
    assert f.shape == (N_BATCH, FEAT) and B.shape == (N_BATCH, T_QUERY, K_BASIS)
    assert jnp.allclose(f, f_ref, atol=1e-4, rtol=1e-4)
    assert jnp.allclose(B, B_ref, atol=1e-4, rtol=1e-4)

    print("KERNEL_OK")
</pallas_src>

<mosaic_0001>
module attributes {stable_mosaic.version = 11 : i64} {
  func.func @_fused_kernel(%arg0: memref<48x4xf32, #tpu.memory_space<vmem>>, %arg1: memref<288x128xf32, #tpu.memory_space<vmem>>, %arg2: memref<16x128xf32, #tpu.memory_space<vmem>>) attributes {dimension_semantics = [], scalar_prefetch = 0 : i64, scratch_operands = 0 : i64, tpu.core_type = #tpu.core_type<tc>} {
    %c0 = arith.constant 0 : index
    %c0_0 = arith.constant 0 : index
    %0 = vector.load %arg0[%c0, %c0_0] : memref<48x4xf32, #tpu.memory_space<vmem>>, vector<32x4xf32>
    %c32 = arith.constant 32 : index
    %c0_1 = arith.constant 0 : index
    %1 = vector.load %arg0[%c32, %c0_1] : memref<48x4xf32, #tpu.memory_space<vmem>>, vector<16x4xf32>
    %c224 = arith.constant 224 : index
    %c0_2 = arith.constant 0 : index
    %2 = vector.load %arg1[%c224, %c0_2] : memref<288x128xf32, #tpu.memory_space<vmem>>, vector<32x32xf32>
    %c256 = arith.constant 256 : index
    %c0_3 = arith.constant 0 : index
    %3 = vector.load %arg1[%c256, %c0_3] : memref<288x128xf32, #tpu.memory_space<vmem>>, vector<32x32xf32>
    %c0_4 = arith.constant 0 : index
    %c0_5 = arith.constant 0 : index
    %4 = vector.load %arg1[%c0_4, %c0_5] : memref<288x128xf32, #tpu.memory_space<vmem>>, vector<12x32xf32>
    %c16 = arith.constant 16 : index
    %c0_6 = arith.constant 0 : index
    %5 = vector.load %arg1[%c16, %c0_6] : memref<288x128xf32, #tpu.memory_space<vmem>>, vector<96x32xf32>
    %c112 = arith.constant 112 : index
    %c0_7 = arith.constant 0 : index
    %6 = vector.load %arg1[%c112, %c0_7] : memref<288x128xf32, #tpu.memory_space<vmem>>, vector<32x32xf32>
    %c144 = arith.constant 144 : index
    %c0_8 = arith.constant 0 : index
    %7 = vector.load %arg1[%c144, %c0_8] : memref<288x128xf32, #tpu.memory_space<vmem>>, vector<32x32xf32>
    %c176 = arith.constant 176 : index
    %c0_9 = arith.constant 0 : index
    %8 = vector.load %arg1[%c176, %c0_9] : memref<288x128xf32, #tpu.memory_space<vmem>>, vector<32x128xf32>
    %c208 = arith.constant 208 : index
    %c0_10 = arith.constant 0 : index
    %9 = vector.load %arg1[%c208, %c0_10] : memref<288x128xf32, #tpu.memory_space<vmem>>, vector<1x32xf32>
    %c209 = arith.constant 209 : index
    %c0_11 = arith.constant 0 : index
    %10 = vector.load %arg1[%c209, %c0_11] : memref<288x128xf32, #tpu.memory_space<vmem>>, vector<1x32xf32>
    %c210 = arith.constant 210 : index
    %c0_12 = arith.constant 0 : index
    %11 = vector.load %arg1[%c210, %c0_12] : memref<288x128xf32, #tpu.memory_space<vmem>>, vector<1x32xf32>
    %c211 = arith.constant 211 : index
    %c0_13 = arith.constant 0 : index
    %12 = vector.load %arg1[%c211, %c0_13] : memref<288x128xf32, #tpu.memory_space<vmem>>, vector<1x32xf32>
    %c212 = arith.constant 212 : index
    %c0_14 = arith.constant 0 : index
    %13 = vector.load %arg1[%c212, %c0_14] : memref<288x128xf32, #tpu.memory_space<vmem>>, vector<2x32xf32>
    %c214 = arith.constant 214 : index
    %c0_15 = arith.constant 0 : index
    %14 = vector.load %arg1[%c214, %c0_15] : memref<288x128xf32, #tpu.memory_space<vmem>>, vector<1x128xf32>
    %c216 = arith.constant 216 : index
    %c0_16 = arith.constant 0 : index
    %15 = vector.load %arg1[%c216, %c0_16] : memref<288x128xf32, #tpu.memory_space<vmem>>, vector<2x32xf32>
    %cst = arith.constant dense<0.000000e+00> : vector<32x4xf32>
    %16 = tpu.matmul %2, %0, %cst {dimension_numbers = #tpu.dot_dimension_numbers<[1], [0], [0], [1], [0, 0, 1, 1], [], []>} : vector<32x32xf32>, vector<32x4xf32>, vector<32x4xf32> -> vector<32x4xf32>
    %cst_17 = arith.constant dense<0.000000e+00> : vector<32x4xf32>
    %17 = tpu.matmul %3, %0, %cst_17 {dimension_numbers = #tpu.dot_dimension_numbers<[1], [0], [0], [1], [0, 0, 1, 1], [], []>} : vector<32x32xf32>, vector<32x4xf32>, vector<32x4xf32> -> vector<32x4xf32>
    %18 = tpu.concatenate %16, %0, %17 in 1 : vector<32x4xf32>, vector<32x4xf32>, vector<32x4xf32> -> vector<32x12xf32>
    %cst_18 = arith.constant dense<0.000000e+00> : vector<32x32xf32>
    %19 = tpu.matmul %18, %4, %cst_18 {dimension_numbers = #tpu.dot_dimension_numbers<[1], [0], [0], [1], [0, 0, 1, 1], [], []>} : vector<32x12xf32>, vector<12x32xf32>, vector<32x32xf32> -> vector<32x32xf32>
    %20 = vector.broadcast %9 : vector<1x32xf32> to vector<32x32xf32>
    %21 = arith.addf %19, %20 : vector<32x32xf32>
    %cst_19 = arith.constant 0.000000e+00 : f32
    %22 = vector.broadcast %cst_19 : f32 to vector<32x32xf32>
    %23 = arith.maximumf %21, %22 : vector<32x32xf32>
    %cst_20 = arith.constant dense<0.000000e+00> : vector<32x32xf32>
    %24 = tpu.matmul %2, %23, %cst_20 {dimension_numbers = #tpu.dot_dimension_numbers<[1], [0], [0], [1], [0, 0, 1, 1], [], []>} : vector<32x32xf32>, vector<32x32xf32>, vector<32x32xf32> -> vector<32x32xf32>
    %cst_21 = arith.constant dense<0.000000e+00> : vector<32x32xf32>
    %25 = tpu.matmul %3, %23, %cst_21 {dimension_numbers = #tpu.dot_dimension_numbers<[1], [0], [0], [1], [0, 0, 1, 1], [], []>} : vector<32x32xf32>, vector<32x32xf32>, vector<32x32xf32> -> vector<32x32xf32>
    %26 = tpu.concatenate %24, %23, %25 in 1 : vector<32x32xf32>, vector<32x32xf32>, vector<32x32xf32> -> vector<32x96xf32>
    %cst_22 = arith.constant dense<0.000000e+00> : vector<32x32xf32>
    %27 = tpu.matmul %26, %5, %cst_22 {dimension_numbers = #tpu.dot_dimension_numbers<[1], [0], [0], [1], [0, 0, 1, 1], [], []>} : vector<32x96xf32>, vector<96x32xf32>, vector<32x32xf32> -> vector<32x32xf32>
    %28 = vector.broadcast %10 : vector<1x32xf32> to vector<32x32xf32>
    %29 = arith.addf %27, %28 : vector<32x32xf32>
    %cst_23 = arith.constant 0.000000e+00 : f32
    %30 = vector.broadcast %cst_23 : f32 to vector<32x32xf32>
    %31 = arith.maximumf %29, %30 : vector<32x32xf32>
    %cst_24 = arith.constant dense<0.000000e+00> : vector<2x32xf32>
    %32 = tpu.matmul %15, %31, %cst_24 {dimension_numbers = #tpu.dot_dimension_numbers<[1], [0], [0], [1], [0, 0, 1, 1], [], []>} : vector<2x32xf32>, vector<32x32xf32>, vector<2x32xf32> -> vector<2x32xf32>
    %cst_25 = arith.constant dense<0.000000e+00> : vector<2x32xf32>
    %33 = tpu.matmul %32, %6, %cst_25 {dimension_numbers = #tpu.dot_dimension_numbers<[1], [0], [0], [1], [0, 0, 1, 1], [], []>} : vector<2x32xf32>, vector<32x32xf32>, vector<2x32xf32> -> vector<2x32xf32>
    %34 = vector.broadcast %11 : vector<1x32xf32> to vector<2x32xf32>
    %35 = arith.addf %33, %34 : vector<2x32xf32>
    %cst_26 = arith.constant dense<0.000000e+00> : vector<2x32xf32>
    %36 = tpu.matmul %35, %7, %cst_26 {dimension_numbers = #tpu.dot_dimension_numbers<[1], [0], [0], [1], [0, 0, 1, 1], [], []>} : vector<2x32xf32>, vector<32x32xf32>, vector<2x32xf32> -> vector<2x32xf32>
    %37 = vector.broadcast %12 : vector<1x32xf32> to vector<2x32xf32>
    %38 = arith.addf %36, %37 : vector<2x32xf32>
    %39 = tpu.concatenate %38, %13 in 0 : vector<2x32xf32>, vector<2x32xf32> -> vector<4x32xf32>
    %cst_27 = arith.constant dense<0.000000e+00> : vector<16x32xf32>
    %40 = tpu.matmul %1, %39, %cst_27 {dimension_numbers = #tpu.dot_dimension_numbers<[1], [0], [0], [1], [0, 0, 1, 1], [], []>} : vector<16x4xf32>, vector<4x32xf32>, vector<16x32xf32> -> vector<16x32xf32>
    %cst_28 = arith.constant 0.000000e+00 : f32
    %41 = vector.broadcast %cst_28 : f32 to vector<16x32xf32>
    %42 = arith.maximumf %40, %41 : vector<16x32xf32>
    %cst_29 = arith.constant dense<0.000000e+00> : vector<16x128xf32>
    %43 = tpu.matmul %42, %8, %cst_29 {dimension_numbers = #tpu.dot_dimension_numbers<[1], [0], [0], [1], [0, 0, 1, 1], [], []>} : vector<16x32xf32>, vector<32x128xf32>, vector<16x128xf32> -> vector<16x128xf32>
    %44 = vector.broadcast %14 : vector<1x128xf32> to vector<16x128xf32>
    %45 = arith.addf %43, %44 : vector<16x128xf32>
    %c0_30 = arith.constant 0 : index
    %c0_31 = arith.constant 0 : index
    %46 = vector.load %arg2[%c0_30, %c0_31] : memref<16x128xf32, #tpu.memory_space<vmem>>, vector<16x128xf32>
    tpu.vector_store %arg2[%c0_30, %c0_31], %45 {strides = array<i32>} : memref<16x128xf32, #tpu.memory_space<vmem>>, vector<16x128xf32>,
    %c0_32 = arith.constant 0 : index
    %c8 = arith.constant 8 : index
    %47 = vector.load %arg2[%c0_32, %c8] : memref<16x128xf32, #tpu.memory_space<vmem>>, vector<2x32xf32>
    tpu.vector_store %arg2[%c0_32, %c8], %35 {strides = array<i32>} : memref<16x128xf32, #tpu.memory_space<vmem>>, vector<2x32xf32>,
    return
  }
}

</mosaic_0001>

<llo_original>
// kernel: trajectory_embedding_model.1
$region0: #{trajectory_embedding_model.1}
  #allocation0 [shape = 'u32[]', space=smem, size = 0x4, offset = 0x4, fixed_abs, tag = 'smem constant byte address 0x4 - core index']
  #allocation1 [shape = 'u32[144,128]{1,0:T(1,128)}', space=vmem, size = 0x12000, scoped, tag = 'internal scratch']
  %s0 = inlined_call_operand.vmem [shape: f32[48,4], index: 0, kind: input, shape index: {}]
  %s1 = inlined_call_operand.hbm [shape: f32[288,128], index: 1, kind: input, shape index: {}]
  %s2 = inlined_call_operand.vmem [shape: f32[16,128], index: 2, kind: output, shape index: {}]
  %s3 = sld [smem:[#allocation0]]
  $region22: #{trajectory_embedding_model.1} parent=0
    _
  %s5 = ssub.s32 1, %s3
  %s6 = scalar_select 0, %s5, %s3
  $region1: #{trajectory_embedding_model.1} parent=0
    #allocation2 [shape = 'u8[147456]{0}', space=vmem, size = 0x24000, scoped, tag = 'input window, operand 1, single buffered']
    #allocation3 [shape = 's32[1]{0}', space=sflag, size = 0x4, scoped, tag = 'scoped memory for trajectory_embedding_model.1']
    %7 = vsyncpa [#allocation3], 0
    // Predicated region
    $region2: #{trajectory_embedding_model.1} parent=1 // pred_check
      _
    $region3: #{trajectory_embedding_model.1} parent=1 // pred_check_branch
      %9 = sbr.rel (0) target = $region5
    $region4: #{trajectory_embedding_model.1} parent=1 // pred_region
      _
    $region5: #{trajectory_embedding_model.1} parent=1 // pred_fallthru
      _
    // Predicated region
    $region6: #{trajectory_embedding_model.1} parent=1 // pred_check
      _
    $region7: #{trajectory_embedding_model.1} parent=1 // pred_check_branch
      %11 = sbr.rel (0) target = $region9
    $region8: #{trajectory_embedding_model.1} parent=1 // pred_region
      %s13 = ssub.s32 4608, 4608
      %14 = vsyncadd [#allocation3], %s13
      %s15 = sshll.u32 [#allocation2], 4
      %s16 = int_to_ptr.vmem [resolvable:$true] %s15
      %21 = dma.hbm_to_vmem [thread:$0]  %s1, 4608, %s16, [#allocation3], 128, 128, 8
    $region9: #{trajectory_embedding_model.1} parent=1 // pred_fallthru
      _
    // Predicated region
    $region10: #{trajectory_embedding_model.1} parent=1 // pred_check
      _
    $region11: #{trajectory_embedding_model.1} parent=1 // pred_check_branch
      %23 = sbr.rel (0) target = $region13
    $region12: #{trajectory_embedding_model.1} parent=1 // pred_region
      %24 = dma.done [#allocation3], 4608
    $region13: #{trajectory_embedding_model.1} parent=1 // pred_fallthru
      _
    %v25 = vld [vmem:[%s0] sm:$0xff]
    %v26 = vld [vmem:[%s0 + $0x8] sm:$0xff]
    %v27 = vld [vmem:[%s0 + $0x10] sm:$0xff]
    %v28 = vld [vmem:[%s0 + $0x18] sm:$0xff]
    %v29 = vld [vmem:[%s0 + $0x20] sm:$0xff]
    %v30 = vld [vmem:[%s0 + $0x28] sm:$0xff]
    %v31 = vld [vmem:[#allocation2 + $0xe0] sm:$0xff]
    %v32 = vld [vmem:[#allocation2 + $0xe8] sm:$0xff]
    %v33 = vld [vmem:[#allocation2 + $0xf0] sm:$0xff]
    %v34 = vld [vmem:[#allocation2 + $0xf8] sm:$0xff]
    %v35 = vld [vmem:[#allocation2 + $0x100] sm:$0xff]
    %v36 = vld [vmem:[#allocation2 + $0x108] sm:$0xff]
    %v37 = vld [vmem:[#allocation2 + $0x110] sm:$0xff]
    %v38 = vld [vmem:[#allocation2 + $0x118] sm:$0xff]
    %v39 = vld [vmem:[#allocation2] sm:$0xff]
    %v40 = vld [vmem:[#allocation2 + $0x8] sm:$0xf]
    %v41 = vld [vmem:[#allocation2 + $0x10] sm:$0xff]
    %v42 = vld [vmem:[#allocation2 + $0x18] sm:$0xff]
    %v43 = vld [vmem:[#allocation2 + $0x20] sm:$0xff]
    %v44 = vld [vmem:[#allocation2 + $0x28] sm:$0xff]
    %v45 = vld [vmem:[#allocation2 + $0x30] sm:$0xff]
    %v46 = vld [vmem:[#allocation2 + $0x38] sm:$0xff]
    %v47 = vld [vmem:[#allocation2 + $0x40] sm:$0xff]
    %v48 = vld [vmem:[#allocation2 + $0x48] sm:$0xff]
    %v49 = vld [vmem:[#allocation2 + $0x50] sm:$0xff]
    %v50 = vld [vmem:[#allocation2 + $0x58] sm:$0xff]
    %v51 = vld [vmem:[#allocation2 + $0x60] sm:$0xff]
    %v52 = vld [vmem:[#allocation2 + $0x68] sm:$0xff]
    %v53 = vld [vmem:[#allocation2 + $0x70] sm:$0xff]
    %v54 = vld [vmem:[#allocation2 + $0x78] sm:$0xff]
    %v55 = vld [vmem:[#allocation2 + $0x80] sm:$0xff]
    %v56 = vld [vmem:[#allocation2 + $0x88] sm:$0xff]
    %v57 = vld [vmem:[#allocation2 + $0x90] sm:$0xff]
    %v58 = vld [vmem:[#allocation2 + $0x98] sm:$0xff]
    %v59 = vld [vmem:[#allocation2 + $0xa0] sm:$0xff]
    %v60 = vld [vmem:[#allocation2 + $0xa8] sm:$0xff]
    %v61 = vld [vmem:[#allocation2 + $0xb0] sm:$0xff]
    %v62 = vld [vmem:[#allocation2 + $0xb8] sm:$0xff]
    %v63 = vld [vmem:[#allocation2 + $0xc0] sm:$0xff]
    %v64 = vld [vmem:[#allocation2 + $0xc8] sm:$0xff]
    %v65 = vld [vmem:[#allocation2 + $0xd0] sm:$0x1]
    %v66 = vld [vmem:[#allocation2 + $0xd1] sm:$0x1]
    %v67 = vld [vmem:[#allocation2 + $0xd2] sm:$0x1]
    %v68 = vld [vmem:[#allocation2 + $0xd3] sm:$0x1]
    %v69 = vld [vmem:[#allocation2 + $0xd4] sm:$0x3]
    %v70 = vld [vmem:[#allocation2 + $0xd6] sm:$0x1]
    %v71 = vld [vmem:[#allocation2 + $0xd8] sm:$0x3]
    %vm72 = vcmask 261120
    %v74 = vsel %vm72, %v31, 0
    %v77 = vsel %vm72, %v32, 0
    %v80 = vsel %vm72, %v33, 0
    %v83 = vsel %vm72, %v34, 0
    %85 = vmatprep.subr.mxu0 0.0
    %86 = vmatpush1.msra.mxu0 %v25
    %87 = vmatprep.subr.mxu0 0.0
    %88 = vmatpush1.msra.mxu0 %v26
    %89 = vmatprep.subr.mxu0 0.0
    %90 = vmatpush1.msra.mxu0 %v27
    %91 = vmatprep.subr.mxu0 0.0
    %92 = vmatpush1.msra.mxu0 %v28
    %93 = vmatprep.subr.mxu0 0.0
    %94 = vmatpush1.msra.mxu0 0.0
    %95 = vmatprep.subr.mxu0 0.0
    %96 = vmatpush1.msra.mxu0 0.0
    %97 = vmatprep.subr.mxu0 0.0
    %98 = vmatpush1.msra.mxu0 0.0
    %99 = vmatprep.subr.mxu0 0.0
    %100 = vmatpush1.msra.mxu0 0.0
    %101 = vmatprep.subr.mxu0 0.0
    %102 = vmatpush1.msra.mxu0 0.0
    %103 = vmatprep.subr.mxu0 0.0
    %104 = vmatpush1.msra.mxu0 0.0
    %105 = vmatprep.subr.mxu0 0.0
    %106 = vmatpush1.msra.mxu0 0.0
    %107 = vmatprep.subr.mxu0 0.0
    %108 = vmatpush1.msra.mxu0 0.0
    %109 = vmatprep.subr.mxu0 0.0
    %110 = vmatpush1.msra.mxu0 0.0
    %111 = vmatprep.subr.mxu0 0.0
    %112 = vmatpush1.msra.mxu0 0.0
    %113 = vmatprep.subr.mxu0 0.0
    %114 = vmatpush1.msra.mxu0 0.0
    %115 = vmatprep.subr.mxu0 0.0
    %116 = vmatpush1.msra.mxu0 0.0
    %117 = vmatprep.subr.mxu0 0.0
    %118 = vmatpush1.msra.mxu0 0.0
    %119 = vmatprep.subr.mxu0 0.0
    %120 = vmatpush1.msra.mxu0 0.0
    %121 = vmatprep.subr.mxu0 0.0
    %122 = vmatpush1.msra.mxu0 0.0
    %123 = vmatprep.subr.mxu0 0.0
    %124 = vmatpush1.msra.mxu0 0.0
    %125 = vmatprep.subr.mxu0 0.0
    %126 = vmatpush1.msra.mxu0 0.0
    %127 = vmatprep.subr.mxu0 0.0
    %128 = vmatpush1.msra.mxu0 0.0
    %129 = vmatprep.subr.mxu0 0.0
    %130 = vmatpush1.msra.mxu0 0.0
    %131 = vmatprep.subr.mxu0 0.0
    %132 = vmatpush1.msra.mxu0 0.0
    %133 = vmatprep.subr.mxu0 0.0
    %134 = vmatpush1.msra.mxu0 0.0
    %135 = vmatprep.subr.mxu0 0.0
    %136 = vmatpush1.msra.mxu0 0.0
    %137 = vmatprep.subr.mxu0 0.0
    %138 = vmatpush1.msra.mxu0 0.0
    %139 = vmatprep.subr.mxu0 0.0
    %140 = vmatpush1.msra.mxu0 0.0
    %141 = vmatprep.subr.mxu0 0.0
    %142 = vmatpush1.msra.mxu0 0.0
    %143 = vmatprep.subr.mxu0 0.0
    %144 = vmatpush1.msra.mxu0 0.0
    %145 = vmatprep.subr.mxu0 0.0
    %146 = vmatpush1.msra.mxu0 0.0
    %147 = vmatprep.subr.mxu0 0.0
    %148 = vmatpush1.msra.mxu0 0.0
    %149 = vmatprep.mubr.f32.mxu0 0.0
    %150 = vmatmul.mubr.f32.gmra.mrb[0].mxu0 %v74
    %v151 = vpop.f32.mrb[0].mxu0
    %v152 = vadd.f32 0.0, %v151
    %v153 = vpop.f32.mrb[0].mxu0
    %154 = vmatprep.mubr.f32.mxu0 0.0
    %155 = vmatmul.mubr.f32.gmra.mrb[0].mxu0 %v77
    %v156 = vpop.f32.mrb[0].mxu0
    %v157 = vadd.f32 0.0, %v156
    %v158 = vpop.f32.mrb[0].mxu0
    %159 = vmatprep.mubr.f32.mxu0 0.0
    %160 = vmatmul.mubr.f32.gmra.mrb[0].mxu0 %v80
    %v161 = vpop.f32.mrb[0].mxu0
    %v162 = vadd.f32 0.0, %v161
    %v163 = vpop.f32.mrb[0].mxu0
    %164 = vmatprep.mubr.f32.mxu0 0.0
    %165 = vmatmul.mubr.f32.gmra.mrb[0].mxu0 %v83
    %v166 = vpop.f32.mrb[0].mxu0
    %v167 = vadd.f32 0.0, %v166
    %v168 = vpop.f32.mrb[0].mxu0
    %169 = vdwg.mxu0
    %v171 = vsel %vm72, %v35, 0
    %v174 = vsel %vm72, %v36, 0
    %v177 = vsel %vm72, %v37, 0
    %v180 = vsel %vm72, %v38, 0
    %182 = vmatprep.subr.mxu0 0.0
    %183 = vmatpush1.msra.mxu0 %v25
    %184 = vmatprep.subr.mxu0 0.0
    %185 = vmatpush1.msra.mxu0 %v26
    %186 = vmatprep.subr.mxu0 0.0
    %187 = vmatpush1.msra.mxu0 %v27
    %188 = vmatprep.subr.mxu0 0.0
    %189 = vmatpush1.msra.mxu0 %v28
    %190 = vmatprep.subr.mxu0 0.0
    %191 = vmatpush1.msra.mxu0 0.0
    %192 = vmatprep.subr.mxu0 0.0
    %193 = vmatpush1.msra.mxu0 0.0
    %194 = vmatprep.subr.mxu0 0.0
    %195 = vmatpush1.msra.mxu0 0.0
    %196 = vmatprep.subr.mxu0 0.0
    %197 = vmatpush1.msra.mxu0 0.0
    %198 = vmatprep.subr.mxu0 0.0
    %199 = vmatpush1.msra.mxu0 0.0
    %200 = vmatprep.subr.mxu0 0.0
    %201 = vmatpush1.msra.mxu0 0.0
    %202 = vmatprep.subr.mxu0 0.0
    %203 = vmatpush1.msra.mxu0 0.0
    %204 = vmatprep.subr.mxu0 0.0
    %205 = vmatpush1.msra.mxu0 0.0
    %206 = vmatprep.subr.mxu0 0.0
    %207 = vmatpush1.msra.mxu0 0.0
    %208 = vmatprep.subr.mxu0 0.0
    %209 = vmatpush1.msra.mxu0 0.0
    %210 = vmatprep.subr.mxu0 0.0
    %211 = vmatpush1.msra.mxu0 0.0
    %212 = vmatprep.subr.mxu0 0.0
    %213 = vmatpush1.msra.mxu0 0.0
    %214 = vmatprep.subr.mxu0 0.0
    %215 = vmatpush1.msra.mxu0 0.0
    %216 = vmatprep.subr.mxu0 0.0
    %217 = vmatpush1.msra.mxu0 0.0
    %218 = vmatprep.subr.mxu0 0.0
    %219 = vmatpush1.msra.mxu0 0.0
    %220 = vmatprep.subr.mxu0 0.0
    %221 = vmatpush1.msra.mxu0 0.0
    %222 = vmatprep.subr.mxu0 0.0
    %223 = vmatpush1.msra.mxu0 0.0
    %224 = vmatprep.subr.mxu0 0.0
    %225 = vmatpush1.msra.mxu0 0.0
    %226 = vmatprep.subr.mxu0 0.0
    %227 = vmatpush1.msra.mxu0 0.0
    %228 = vmatprep.subr.mxu0 0.0
    %229 = vmatpush1.msra.mxu0 0.0
    %230 = vmatprep.subr.mxu0 0.0
    %231 = vmatpush1.msra.mxu0 0.0
    %232 = vmatprep.subr.mxu0 0.0
    %233 = vmatpush1.msra.mxu0 0.0
    %234 = vmatprep.subr.mxu0 0.0
    %235 = vmatpush1.msra.mxu0 0.0
    %236 = vmatprep.subr.mxu0 0.0
    %237 = vmatpush1.msra.mxu0 0.0
    %238 = vmatprep.subr.mxu0 0.0
    %239 = vmatpush1.msra.mxu0 0.0
    %240 = vmatprep.subr.mxu0 0.0
    %241 = vmatpush1.msra.mxu0 0.0
    %242 = vmatprep.subr.mxu0 0.0
    %243 = vmatpush1.msra.mxu0 0.0
    %244 = vmatprep.subr.mxu0 0.0
    %245 = vmatpush1.msra.mxu0 0.0
    %246 = vmatprep.mubr.f32.mxu0 0.0
    %247 = vmatmul.mubr.f32.gmra.mrb[0].mxu0 %v171
    %v248 = vpop.f32.mrb[0].mxu0
    %v249 = vadd.f32 0.0, %v248
    %v250 = vpop.f32.mrb[0].mxu0
    %251 = vmatprep.mubr.f32.mxu0 0.0
    %252 = vmatmul.mubr.f32.gmra.mrb[0].mxu0 %v174
    %v253 = vpop.f32.mrb[0].mxu0
    %v254 = vadd.f32 0.0, %v253
    %v255 = vpop.f32.mrb[0].mxu0
    %256 = vmatprep.mubr.f32.mxu0 0.0
    %257 = vmatmul.mubr.f32.gmra.mrb[0].mxu0 %v177
    %v258 = vpop.f32.mrb[0].mxu0
    %v259 = vadd.f32 0.0, %v258
    %v260 = vpop.f32.mrb[0].mxu0
    %261 = vmatprep.mubr.f32.mxu0 0.0
    %262 = vmatmul.mubr.f32.gmra.mrb[0].mxu0 %v180
    %v263 = vpop.f32.mrb[0].mxu0
    %v264 = vadd.f32 0.0, %v263
    %v265 = vpop.f32.mrb[0].mxu0
    %266 = vdwg.mxu0
    %271 = vrot.lane.b32.xlu0 %v25, 4
    %v272 = vpop.permute.xlu0 %271
    %273 = vrot.lane.b32.xlu0 %v26, 4
    %v274 = vpop.permute.xlu0 %273
    %275 = vrot.lane.b32.xlu0 %v27, 4
    %v276 = vpop.permute.xlu0 %275
    %277 = vrot.lane.b32.xlu0 %v28, 4
    %v278 = vpop.permute.xlu0 %277
    %287 = vrot.lane.b32.xlu0 %v249, 8
    %v288 = vpop.permute.xlu0 %287
    %289 = vrot.lane.b32.xlu0 %v254, 8
    %v290 = vpop.permute.xlu0 %289
    %291 = vrot.lane.b32.xlu0 %v259, 8
    %v292 = vpop.permute.xlu0 %291
    %293 = vrot.lane.b32.xlu0 %v264, 8
    %v294 = vpop.permute.xlu0 %293
    %vm299 = vcmask 31744
    %v300 = vsel %vm299, %v152, %v272
    %v301 = vsel %vm299, %v157, %v274
    %v302 = vsel %vm299, %v162, %v276
    %v303 = vsel %vm299, %v167, %v278
    %vm304 = vcmask 64512
    %v305 = vsel %vm304, %v300, %v288
    %v306 = vsel %vm304, %v301, %v290
    %v307 = vsel %vm304, %v302, %v292
    %v308 = vsel %vm304, %v303, %v294
    %v309 = vlaneseq
    %v310 = vshrl.u32 %v309, 7
    %v311 = vsub.s32 0, %v310
    %v312 = vrot.slane %v65, %v311
    %vm313 = vcmask 97280
    %v315 = vsel %vm313, %v305, 0
    %v318 = vsel %vm313, %v306, 0
    %v321 = vsel %vm313, %v307, 0
    %v324 = vsel %vm313, %v308, 0
    %vm326 = vcmask 1043456
    %v328 = vsel %vm326, %v40, 0
    %330 = vmatprep.subr.mxu0 0.0
    %331 = vmatpush1.msra.mxu0 %v39
    %332 = vmatprep.subr.mxu0 0.0
    %333 = vmatpush1.msra.mxu0 %v328
    %334 = vmatprep.subr.mxu0 0.0
    %335 = vmatpush1.msra.mxu0 0.0
    %336 = vmatprep.subr.mxu0 0.0
    %337 = vmatpush1.msra.mxu0 0.0
    %338 = vmatprep.subr.mxu0 0.0
    %339 = vmatpush1.msra.mxu0 0.0
    %340 = vmatprep.subr.mxu0 0.0
    %341 = vmatpush1.msra.mxu0 0.0
    %342 = vmatprep.subr.mxu0 0.0
    %343 = vmatpush1.msra.mxu0 0.0
    %344 = vmatprep.subr.mxu0 0.0
    %345 = vmatpush1.msra.mxu0 0.0
    %346 = vmatprep.subr.mxu0 0.0
    %347 = vmatpush1.msra.mxu0 0.0
    %348 = vmatprep.subr.mxu0 0.0
    %349 = vmatpush1.msra.mxu0 0.0
    %350 = vmatprep.subr.mxu0 0.0
    %351 = vmatpush1.msra.mxu0 0.0
    %352 = vmatprep.subr.mxu0 0.0
    %353 = vmatpush1.msra.mxu0 0.0
    %354 = vmatprep.subr.mxu0 0.0
    %355 = vmatpush1.msra.mxu0 0.0
    %356 = vmatprep.subr.mxu0 0.0
    %357 = vmatpush1.msra.mxu0 0.0
    %358 = vmatprep.subr.mxu0 0.0
    %359 = vmatpush1.msra.mxu0 0.0
    %360 = vmatprep.subr.mxu0 0.0
    %361 = vmatpush1.msra.mxu0 0.0
    %362 = vmatprep.subr.mxu0 0.0
    %363 = vmatpush1.msra.mxu0 0.0
    %364 = vmatprep.subr.mxu0 0.0
    %365 = vmatpush1.msra.mxu0 0.0
    %366 = vmatprep.subr.mxu0 0.0
    %367 = vmatpush1.msra.mxu0 0.0
    %368 = vmatprep.subr.mxu0 0.0
    %369 = vmatpush1.msra.mxu0 0.0
    %370 = vmatprep.subr.mxu0 0.0
    %371 = vmatpush1.msra.mxu0 0.0
    %372 = vmatprep.subr.mxu0 0.0
    %373 = vmatpush1.msra.mxu0 0.0
    %374 = vmatprep.subr.mxu0 0.0
    %375 = vmatpush1.msra.mxu0 0.0
    %376 = vmatprep.subr.mxu0 0.0
    %377 = vmatpush1.msra.mxu0 0.0
    %378 = vmatprep.subr.mxu0 0.0
    %379 = vmatpush1.msra.mxu0 0.0
    %380 = vmatprep.subr.mxu0 0.0
    %381 = vmatpush1.msra.mxu0 0.0
    %382 = vmatprep.subr.mxu0 0.0
    %383 = vmatpush1.msra.mxu0 0.0
    %384 = vmatprep.subr.mxu0 0.0
    %385 = vmatpush1.msra.mxu0 0.0
    %386 = vmatprep.subr.mxu0 0.0
    %387 = vmatpush1.msra.mxu0 0.0
    %388 = vmatprep.subr.mxu0 0.0
    %389 = vmatpush1.msra.mxu0 0.0
    %390 = vmatprep.subr.mxu0 0.0
    %391 = vmatpush1.msra.mxu0 0.0
    %392 = vmatprep.subr.mxu0 0.0
    %393 = vmatpush1.msra.mxu0 0.0
    %394 = vmatprep.mubr.f32.mxu0 0.0
    %395 = vmatmul.mubr.f32.gmra.mrb[0].mxu0 %v315
    %v396 = vpop.f32.mrb[0].mxu0
    %v397 = vadd.f32 %v312, %v396
    %v398 = vpop.f32.mrb[0].mxu0
    %399 = vmatprep.mubr.f32.mxu0 0.0
    %400 = vmatmul.mubr.f32.gmra.mrb[0].mxu0 %v318
    %v401 = vpop.f32.mrb[0].mxu0
    %v402 = vadd.f32 %v312, %v401
    %v403 = vpop.f32.mrb[0].mxu0
    %404 = vmatprep.mubr.f32.mxu0 0.0
    %405 = vmatmul.mubr.f32.gmra.mrb[0].mxu0 %v321
    %v406 = vpop.f32.mrb[0].mxu0
    %v407 = vadd.f32 %v312, %v406
    %v408 = vpop.f32.mrb[0].mxu0
    %409 = vmatprep.mubr.f32.mxu0 0.0
    %410 = vmatmul.mubr.f32.gmra.mrb[0].mxu0 %v324
    %v411 = vpop.f32.mrb[0].mxu0
    %v412 = vadd.f32 %v312, %v411
    %v413 = vpop.f32.mrb[0].mxu0
    %414 = vdwg.mxu0
    %v415 = vmax.f32 %v397, 0.0
    %v416 = vmax.f32 %v402, 0.0
    %v417 = vmax.f32 %v407, 0.0
    %v418 = vmax.f32 %v412, 0.0
    %419 = vmatprep.subr.mxu0 0.0
    %420 = vmatpush1.msra.mxu0 %v415
    %421 = vmatprep.subr.mxu0 0.0
    %422 = vmatpush1.msra.mxu0 %v416
    %423 = vmatprep.subr.mxu0 0.0
    %424 = vmatpush1.msra.mxu0 %v417
    %425 = vmatprep.subr.mxu0 0.0
    %426 = vmatpush1.msra.mxu0 %v418
    %427 = vmatprep.subr.mxu0 0.0
    %428 = vmatpush1.msra.mxu0 0.0
    %429 = vmatprep.subr.mxu0 0.0
    %430 = vmatpush1.msra.mxu0 0.0
    %431 = vmatprep.subr.mxu0 0.0
    %432 = vmatpush1.msra.mxu0 0.0
    %433 = vmatprep.subr.mxu0 0.0
    %434 = vmatpush1.msra.mxu0 0.0
    %435 = vmatprep.subr.mxu0 0.0
    %436 = vmatpush1.msra.mxu0 0.0
    %437 = vmatprep.subr.mxu0 0.0
    %438 = vmatpush1.msra.mxu0 0.0
    %439 = vmatprep.subr.mxu0 0.0
    %440 = vmatpush1.msra.mxu0 0.0
    %441 = vmatprep.subr.mxu0 0.0
    %442 = vmatpush1.msra.mxu0 0.0
    %443 = vmatprep.subr.mxu0 0.0
    %444 = vmatpush1.msra.mxu0 0.0
    %445 = vmatprep.subr.mxu0 0.0
    %446 = vmatpush1.msra.mxu0 0.0
    %447 = vmatprep.subr.mxu0 0.0
    %448 = vmatpush1.msra.mxu0 0.0
    %449 = vmatprep.subr.mxu0 0.0
    %450 = vmatpush1.msra.mxu0 0.0
    %451 = vmatprep.subr.mxu0 0.0
    %452 = vmatpush1.msra.mxu0 0.0
    %453 = vmatprep.subr.mxu0 0.0
    %454 = vmatpush1.msra.mxu0 0.0
    %455 = vmatprep.subr.mxu0 0.0
    %456 = vmatpush1.msra.mxu0 0.0
    %457 = vmatprep.subr.mxu0 0.0
    %458 = vmatpush1.msra.mxu0 0.0
    %459 = vmatprep.subr.mxu0 0.0
    %460 = vmatpush1.msra.mxu0 0.0
    %461 = vmatprep.subr.mxu0 0.0
    %462 = vmatpush1.msra.mxu0 0.0
    %463 = vmatprep.subr.mxu0 0.0
    %464 = vmatpush1.msra.mxu0 0.0
    %465 = vmatprep.subr.mxu0 0.0
    %466 = vmatpush1.msra.mxu0 0.0
    %467 = vmatprep.subr.mxu0 0.0
    %468 = vmatpush1.msra.mxu0 0.0
    %469 = vmatprep.subr.mxu0 0.0
    %470 = vmatpush1.msra.mxu0 0.0
    %471 = vmatprep.subr.mxu0 0.0
    %472 = vmatpush1.msra.mxu0 0.0
    %473 = vmatprep.subr.mxu0 0.0
    %474 = vmatpush1.msra.mxu0 0.0
    %475 = vmatprep.subr.mxu0 0.0
    %476 = vmatpush1.msra.mxu0 0.0
    %477 = vmatprep.subr.mxu0 0.0
    %478 = vmatpush1.msra.mxu0 0.0
    %479 = vmatprep.subr.mxu0 0.0
    %480 = vmatpush1.msra.mxu0 0.0
    %481 = vmatprep.subr.mxu0 0.0
    %482 = vmatpush1.msra.mxu0 0.0
    %483 = vmatprep.mubr.f32.mxu0 0.0
    %484 = vmatmul.mubr.f32.gmra.mrb[0].mxu0 %v74
    %v485 = vpop.f32.mrb[0].mxu0
    %v486 = vadd.f32 0.0, %v485
    %v487 = vpop.f32.mrb[0].mxu0
    %488 = vmatprep.mubr.f32.mxu0 0.0
    %489 = vmatmul.mubr.f32.gmra.mrb[0].mxu0 %v77
    %v490 = vpop.f32.mrb[0].mxu0
    %v491 = vadd.f32 0.0, %v490
    %v492 = vpop.f32.mrb[0].mxu0
    %493 = vmatprep.mubr.f32.mxu0 0.0
    %494 = vmatmul.mubr.f32.gmra.mrb[0].mxu0 %v80
    %v495 = vpop.f32.mrb[0].mxu0
    %v496 = vadd.f32 0.0, %v495
    %v497 = vpop.f32.mrb[0].mxu0
    %498 = vmatprep.mubr.f32.mxu0 0.0
    %499 = vmatmul.mubr.f32.gmra.mrb[0].mxu0 %v83
    %v500 = vpop.f32.mrb[0].mxu0
    %v501 = vadd.f32 0.0, %v500
    %v502 = vpop.f32.mrb[0].mxu0
    %503 = vdwg.mxu0
    %504 = vmatprep.subr.mxu0 0.0
    %505 = vmatpush1.msra.mxu0 %v415
    %506 = vmatprep.subr.mxu0 0.0
    %507 = vmatpush1.msra.mxu0 %v416
    %508 = vmatprep.subr.mxu0 0.0
    %509 = vmatpush1.msra.mxu0 %v417
    %510 = vmatprep.subr.mxu0 0.0
    %511 = vmatpush1.msra.mxu0 %v418
    %512 = vmatprep.subr.mxu0 0.0
    %513 = vmatpush1.msra.mxu0 0.0
    %514 = vmatprep.subr.mxu0 0.0
    %515 = vmatpush1.msra.mxu0 0.0
    %516 = vmatprep.subr.mxu0 0.0
    %517 = vmatpush1.msra.mxu0 0.0
    %518 = vmatprep.subr.mxu0 0.0
    %519 = vmatpush1.msra.mxu0 0.0
    %520 = vmatprep.subr.mxu0 0.0
    %521 = vmatpush1.msra.mxu0 0.0
    %522 = vmatprep.subr.mxu0 0.0
    %523 = vmatpush1.msra.mxu0 0.0
    %524 = vmatprep.subr.mxu0 0.0
    %525 = vmatpush1.msra.mxu0 0.0
    %526 = vmatprep.subr.mxu0 0.0
    %527 = vmatpush1.msra.mxu0 0.0
    %528 = vmatprep.subr.mxu0 0.0
    %529 = vmatpush1.msra.mxu0 0.0
    %530 = vmatprep.subr.mxu0 0.0
    %531 = vmatpush1.msra.mxu0 0.0
    %532 = vmatprep.subr.mxu0 0.0
    %533 = vmatpush1.msra.mxu0 0.0
    %534 = vmatprep.subr.mxu0 0.0
    %535 = vmatpush1.msra.mxu0 0.0
    %536 = vmatprep.subr.mxu0 0.0
    %537 = vmatpush1.msra.mxu0 0.0
    %538 = vmatprep.subr.mxu0 0.0
    %539 = vmatpush1.msra.mxu0 0.0
    %540 = vmatprep.subr.mxu0 0.0
    %541 = vmatpush1.msra.mxu0 0.0
    %542 = vmatprep.subr.mxu0 0.0
    %543 = vmatpush1.msra.mxu0 0.0
    %544 = vmatprep.subr.mxu0 0.0
    %545 = vmatpush1.msra.mxu0 0.0
    %546 = vmatprep.subr.mxu0 0.0
    %547 = vmatpush1.msra.mxu0 0.0
    %548 = vmatprep.subr.mxu0 0.0
    %549 = vmatpush1.msra.mxu0 0.0
    %550 = vmatprep.subr.mxu0 0.0
    %551 = vmatpush1.msra.mxu0 0.0
    %552 = vmatprep.subr.mxu0 0.0
    %553 = vmatpush1.msra.mxu0 0.0
    %554 = vmatprep.subr.mxu0 0.0
    %555 = vmatpush1.msra.mxu0 0.0
    %556 = vmatprep.subr.mxu0 0.0
    %557 = vmatpush1.msra.mxu0 0.0
    %558 = vmatprep.subr.mxu0 0.0
    %559 = vmatpush1.msra.mxu0 0.0
    %560 = vmatprep.subr.mxu0 0.0
    %561 = vmatpush1.msra.mxu0 0.0
    %562 = vmatprep.subr.mxu0 0.0
    %563 = vmatpush1.msra.mxu0 0.0
    %564 = vmatprep.subr.mxu0 0.0
    %565 = vmatpush1.msra.mxu0 0.0
    %566 = vmatprep.subr.mxu0 0.0
    %567 = vmatpush1.msra.mxu0 0.0
    %568 = vmatprep.mubr.f32.mxu0 0.0
    %569 = vmatmul.mubr.f32.gmra.mrb[0].mxu0 %v171
    %v570 = vpop.f32.mrb[0].mxu0
    %v571 = vadd.f32 0.0, %v570
    %v572 = vpop.f32.mrb[0].mxu0
    %573 = vmatprep.mubr.f32.mxu0 0.0
    %574 = vmatmul.mubr.f32.gmra.mrb[0].mxu0 %v174
    %v575 = vpop.f32.mrb[0].mxu0
    %v576 = vadd.f32 0.0, %v575
    %v577 = vpop.f32.mrb[0].mxu0
    %578 = vmatprep.mubr.f32.mxu0 0.0
    %579 = vmatmul.mubr.f32.gmra.mrb[0].mxu0 %v177
    %v580 = vpop.f32.mrb[0].mxu0
    %v581 = vadd.f32 0.0, %v580
    %v582 = vpop.f32.mrb[0].mxu0
    %583 = vmatprep.mubr.f32.mxu0 0.0
    %584 = vmatmul.mubr.f32.gmra.mrb[0].mxu0 %v180
    %v585 = vpop.f32.mrb[0].mxu0
    %v586 = vadd.f32 0.0, %v585
    %v587 = vpop.f32.mrb[0].mxu0
    %588 = vdwg.mxu0
    %593 = vrot.lane.b32.xlu0 %v415, 32
    %v594 = vpop.permute.xlu0 %593
    %595 = vrot.lane.b32.xlu0 %v416, 32
    %v596 = vpop.permute.xlu0 %595
    %597 = vrot.lane.b32.xlu0 %v417, 32
    %v598 = vpop.permute.xlu0 %597
    %599 = vrot.lane.b32.xlu0 %v418, 32
    %v600 = vpop.permute.xlu0 %599
    %609 = vrot.lane.b32.xlu0 %v571, 64
    %v610 = vpop.permute.xlu0 %609
    %611 = vrot.lane.b32.xlu0 %v576, 64
    %v612 = vpop.permute.xlu0 %611
    %613 = vrot.lane.b32.xlu0 %v581, 64
    %v614 = vpop.permute.xlu0 %613
    %615 = vrot.lane.b32.xlu0 %v586, 64
    %v616 = vpop.permute.xlu0 %615
    %v621 = vsel %vm72, %v486, %v594
    %v622 = vsel %vm72, %v491, %v596
    %v623 = vsel %vm72, %v496, %v598
    %v624 = vsel %vm72, %v501, %v600
    %vm625 = vcmask 523264
    %v626 = vsel %vm625, %v621, %v610
    %v627 = vsel %vm625, %v622, %v612
    %v628 = vsel %vm625, %v623, %v614
    %v629 = vsel %vm625, %v624, %v616
    %v630 = vlaneseq
    %v631 = vshrl.u32 %v630, 7
    %v632 = vsub.s32 0, %v631
    %v633 = vrot.slane %v66, %v632
    %vm634 = vcmask 785408
    %v636 = vsel %vm634, %v626, 0
    %v639 = vsel %vm634, %v627, 0
    %v642 = vsel %vm634, %v628, 0
    %v645 = vsel %vm634, %v629, 0
    %647 = vmatprep.subr.mxu0 0.0
    %648 = vmatpush1.msra.mxu0 %v41
    %649 = vmatprep.subr.mxu0 0.0
    %650 = vmatpush1.msra.mxu0 %v42
    %651 = vmatprep.subr.mxu0 0.0
    %652 = vmatpush1.msra.mxu0 %v43
    %653 = vmatprep.subr.mxu0 0.0
    %654 = vmatpush1.msra.mxu0 %v44
    %655 = vmatprep.subr.mxu0 0.0
    %656 = vmatpush1.msra.mxu0 %v45
    %657 = vmatprep.subr.mxu0 0.0
    %658 = vmatpush1.msra.mxu0 %v46
    %659 = vmatprep.subr.mxu0 0.0
    %660 = vmatpush1.msra.mxu0 %v47
    %661 = vmatprep.subr.mxu0 0.0
    %662 = vmatpush1.msra.mxu0 %v48
    %663 = vmatprep.subr.mxu0 0.0
    %664 = vmatpush1.msra.mxu0 %v49
    %665 = vmatprep.subr.mxu0 0.0
    %666 = vmatpush1.msra.mxu0 %v50
    %667 = vmatprep.subr.mxu0 0.0
    %668 = vmatpush1.msra.mxu0 %v51
    %669 = vmatprep.subr.mxu0 0.0
    %670 = vmatpush1.msra.mxu0 %v52
    %671 = vmatprep.subr.mxu0 0.0
    %672 = vmatpush1.msra.mxu0 0.0
    %673 = vmatprep.subr.mxu0 0.0
    %674 = vmatpush1.msra.mxu0 0.0
    %675 = vmatprep.subr.mxu0 0.0
    %676 = vmatpush1.msra.mxu0 0.0
    %677 = vmatprep.subr.mxu0 0.0
    %678 = vmatpush1.msra.mxu0 0.0
    %679 = vmatprep.subr.mxu0 0.0
    %680 = vmatpush1.msra.mxu0 0.0
    %681 = vmatprep.subr.mxu0 0.0
    %682 = vmatpush1.msra.mxu0 0.0
    %683 = vmatprep.subr.mxu0 0.0
    %684 = vmatpush1.msra.mxu0 0.0
    %685 = vmatprep.subr.mxu0 0.0
    %686 = vmatpush1.msra.mxu0 0.0
    %687 = vmatprep.subr.mxu0 0.0
    %688 = vmatpush1.msra.mxu0 0.0
    %689 = vmatprep.subr.mxu0 0.0
    %690 = vmatpush1.msra.mxu0 0.0
    %691 = vmatprep.subr.mxu0 0.0
    %692 = vmatpush1.msra.mxu0 0.0
    %693 = vmatprep.subr.mxu0 0.0
    %694 = vmatpush1.msra.mxu0 0.0
    %695 = vmatprep.subr.mxu0 0.0
    %696 = vmatpush1.msra.mxu0 0.0
    %697 = vmatprep.subr.mxu0 0.0
    %698 = vmatpush1.msra.mxu0 0.0
    %699 = vmatprep.subr.mxu0 0.0
    %700 = vmatpush1.msra.mxu0 0.0
    %701 = vmatprep.subr.mxu0 0.0
    %702 = vmatpush1.msra.mxu0 0.0
    %703 = vmatprep.subr.mxu0 0.0
    %704 = vmatpush1.msra.mxu0 0.0
    %705 = vmatprep.subr.mxu0 0.0
    %706 = vmatpush1.msra.mxu0 0.0
    %707 = vmatprep.subr.mxu0 0.0
    %708 = vmatpush1.msra.mxu0 0.0
    %709 = vmatprep.subr.mxu0 0.0
    %710 = vmatpush1.msra.mxu0 0.0
    %711 = vmatprep.mubr.f32.mxu0 0.0
    %712 = vmatmul.mubr.f32.gmra.mrb[0].mxu0 %v636
    %v713 = vpop.f32.mrb[0].mxu0
    %v714 = vadd.f32 %v633, %v713
    %v715 = vpop.f32.mrb[0].mxu0
    %716 = vmatprep.mubr.f32.mxu0 0.0
    %717 = vmatmul.mubr.f32.gmra.mrb[0].mxu0 %v639
    %v718 = vpop.f32.mrb[0].mxu0
    %v719 = vadd.f32 %v633, %v718
    %v720 = vpop.f32.mrb[0].mxu0
    %721 = vmatprep.mubr.f32.mxu0 0.0
    %722 = vmatmul.mubr.f32.gmra.mrb[0].mxu0 %v642
    %v723 = vpop.f32.mrb[0].mxu0
    %v724 = vadd.f32 %v633, %v723
    %v725 = vpop.f32.mrb[0].mxu0
    %726 = vmatprep.mubr.f32.mxu0 0.0
    %727 = vmatmul.mubr.f32.gmra.mrb[0].mxu0 %v645
    %v728 = vpop.f32.mrb[0].mxu0
    %v729 = vadd.f32 %v633, %v728
    %v730 = vpop.f32.mrb[0].mxu0
    %731 = vdwg.mxu0
    %v732 = vmax.f32 %v714, 0.0
    %v733 = vmax.f32 %v719, 0.0
    %v734 = vmax.f32 %v724, 0.0
    %v735 = vmax.f32 %v729, 0.0
    %v737 = vsel %vm72, %v71, 0
    %739 = vmatprep.subr.mxu0 0.0
    %740 = vmatpush1.msra.mxu0 %v732
    %741 = vmatprep.subr.mxu0 0.0
    %742 = vmatpush1.msra.mxu0 %v733
    %743 = vmatprep.subr.mxu0 0.0
    %744 = vmatpush1.msra.mxu0 %v734
    %745 = vmatprep.subr.mxu0 0.0
    %746 = vmatpush1.msra.mxu0 %v735
    %747 = vmatprep.subr.mxu0 0.0
    %748 = vmatpush1.msra.mxu0 0.0
    %749 = vmatprep.subr.mxu0 0.0
    %750 = vmatpush1.msra.mxu0 0.0
    %751 = vmatprep.subr.mxu0 0.0
    %752 = vmatpush1.msra.mxu0 0.0
    %753 = vmatprep.subr.mxu0 0.0
    %754 = vmatpush1.msra.mxu0 0.0
    %755 = vmatprep.subr.mxu0 0.0
    %756 = vmatpush1.msra.mxu0 0.0
    %757 = vmatprep.subr.mxu0 0.0
    %758 = vmatpush1.msra.mxu0 0.0
    %759 = vmatprep.subr.mxu0 0.0
    %760 = vmatpush1.msra.mxu0 0.0
    %761 = vmatprep.subr.mxu0 0.0
    %762 = vmatpush1.msra.mxu0 0.0
    %763 = vmatprep.subr.mxu0 0.0
    %764 = vmatpush1.msra.mxu0 0.0
    %765 = vmatprep.subr.mxu0 0.0
    %766 = vmatpush1.msra.mxu0 0.0
    %767 = vmatprep.subr.mxu0 0.0
    %768 = vmatpush1.msra.mxu0 0.0
    %769 = vmatprep.subr.mxu0 0.0
    %770 = vmatpush1.msra.mxu0 0.0
    %771 = vmatprep.subr.mxu0 0.0
    %772 = vmatpush1.msra.mxu0 0.0
    %773 = vmatprep.subr.mxu0 0.0
    %774 = vmatpush1.msra.mxu0 0.0
    %775 = vmatprep.subr.mxu0 0.0
    %776 = vmatpush1.msra.mxu0 0.0
    %777 = vmatprep.subr.mxu0 0.0
    %778 = vmatpush1.msra.mxu0 0.0
    %779 = vmatprep.subr.mxu0 0.0
    %780 = vmatpush1.msra.mxu0 0.0
    %781 = vmatprep.subr.mxu0 0.0
    %782 = vmatpush1.msra.mxu0 0.0
    %783 = vmatprep.subr.mxu0 0.0
    %784 = vmatpush1.msra.mxu0 0.0
    %785 = vmatprep.subr.mxu0 0.0
    %786 = vmatpush1.msra.mxu0 0.0
    %787 = vmatprep.subr.mxu0 0.0
    %788 = vmatpush1.msra.mxu0 0.0
    %789 = vmatprep.subr.mxu0 0.0
    %790 = vmatpush1.msra.mxu0 0.0
    %791 = vmatprep.subr.mxu0 0.0
    %792 = vmatpush1.msra.mxu0 0.0
    %793 = vmatprep.subr.mxu0 0.0
    %794 = vmatpush1.msra.mxu0 0.0
    %795 = vmatprep.subr.mxu0 0.0
    %796 = vmatpush1.msra.mxu0 0.0
    %797 = vmatprep.subr.mxu0 0.0
    %798 = vmatpush1.msra.mxu0 0.0
    %799 = vmatprep.subr.mxu0 0.0
    %800 = vmatpush1.msra.mxu0 0.0
    %801 = vmatprep.subr.mxu0 0.0
    %802 = vmatpush1.msra.mxu0 0.0
    %803 = vmatprep.mubr.f32.mxu0 0.0
    %804 = vmatmul.mubr.f32.gmra.mrb[0].mxu0 %v737
    %v805 = vpop.f32.mrb[0].mxu0
    %v806 = vadd.f32 0.0, %v805
    %v807 = vpop.f32.mrb[0].mxu0
    %808 = vdwg.mxu0
    %v809 = vlaneseq
    %v810 = vshrl.u32 %v809, 7
    %v811 = vsub.s32 0, %v810
    %v812 = vrot.slane %v67, %v811
    %v814 = vsel %vm72, %v806, 0
    %816 = vmatprep.subr.mxu0 0.0
    %817 = vmatpush1.msra.mxu0 %v53
    %818 = vmatprep.subr.mxu0 0.0
    %819 = vmatpush1.msra.mxu0 %v54
    %820 = vmatprep.subr.mxu0 0.0
    %821 = vmatpush1.msra.mxu0 %v55
    %822 = vmatprep.subr.mxu0 0.0
    %823 = vmatpush1.msra.mxu0 %v56
    %824 = vmatprep.subr.mxu0 0.0
    %825 = vmatpush1.msra.mxu0 0.0
    %826 = vmatprep.subr.mxu0 0.0
    %827 = vmatpush1.msra.mxu0 0.0
    %828 = vmatprep.subr.mxu0 0.0
    %829 = vmatpush1.msra.mxu0 0.0
    %830 = vmatprep.subr.mxu0 0.0
    %831 = vmatpush1.msra.mxu0 0.0
    %832 = vmatprep.subr.mxu0 0.0
    %833 = vmatpush1.msra.mxu0 0.0
    %834 = vmatprep.subr.mxu0 0.0
    %835 = vmatpush1.msra.mxu0 0.0
    %836 = vmatprep.subr.mxu0 0.0
    %837 = vmatpush1.msra.mxu0 0.0
    %838 = vmatprep.subr.mxu0 0.0
    %839 = vmatpush1.msra.mxu0 0.0
    %840 = vmatprep.subr.mxu0 0.0
    %841 = vmatpush1.msra.mxu0 0.0
    %842 = vmatprep.subr.mxu0 0.0
    %843 = vmatpush1.msra.mxu0 0.0
    %844 = vmatprep.subr.mxu0 0.0
    %845 = vmatpush1.msra.mxu0 0.0
    %846 = vmatprep.subr.mxu0 0.0
    %847 = vmatpush1.msra.mxu0 0.0
    %848 = vmatprep.subr.mxu0 0.0
    %849 = vmatpush1.msra.mxu0 0.0
    %850 = vmatprep.subr.mxu0 0.0
    %851 = vmatpush1.msra.mxu0 0.0
    %852 = vmatprep.subr.mxu0 0.0
    %853 = vmatpush1.msra.mxu0 0.0
    %854 = vmatprep.subr.mxu0 0.0
    %855 = vmatpush1.msra.mxu0 0.0
    %856 = vmatprep.subr.mxu0 0.0
    %857 = vmatpush1.msra.mxu0 0.0
    %858 = vmatprep.subr.mxu0 0.0
    %859 = vmatpush1.msra.mxu0 0.0
    %860 = vmatprep.subr.mxu0 0.0
    %861 = vmatpush1.msra.mxu0 0.0
    %862 = vmatprep.subr.mxu0 0.0
    %863 = vmatpush1.msra.mxu0 0.0
    %864 = vmatprep.subr.mxu0 0.0
    %865 = vmatpush1.msra.mxu0 0.0
    %866 = vmatprep.subr.mxu0 0.0
    %867 = vmatpush1.msra.mxu0 0.0
    %868 = vmatprep.subr.mxu0 0.0
    %869 = vmatpush1.msra.mxu0 0.0
    %870 = vmatprep.subr.mxu0 0.0
    %871 = vmatpush1.msra.mxu0 0.0
    %872 = vmatprep.subr.mxu0 0.0
    %873 = vmatpush1.msra.mxu0 0.0
    %874 = vmatprep.subr.mxu0 0.0
    %875 = vmatpush1.msra.mxu0 0.0
    %876 = vmatprep.subr.mxu0 0.0
    %877 = vmatpush1.msra.mxu0 0.0
    %878 = vmatprep.subr.mxu0 0.0
    %879 = vmatpush1.msra.mxu0 0.0
    %880 = vmatprep.mubr.f32.mxu0 0.0
    %881 = vmatmul.mubr.f32.gmra.mrb[0].mxu0 %v814
    %v882 = vpop.f32.mrb[0].mxu0
    %v883 = vadd.f32 %v812, %v882
    %v884 = vpop.f32.mrb[0].mxu0
    %885 = vdwg.mxu0
    %v886 = vlaneseq
    %v887 = vshrl.u32 %v886, 7
    %v888 = vsub.s32 0, %v887
    %v889 = vrot.slane %v68, %v888
    %v891 = vsel %vm72, %v883, 0
    %893 = vmatprep.subr.mxu0 0.0
    %894 = vmatpush1.msra.mxu0 %v57
    %895 = vmatprep.subr.mxu0 0.0
    %896 = vmatpush1.msra.mxu0 %v58
    %897 = vmatprep.subr.mxu0 0.0
    %898 = vmatpush1.msra.mxu0 %v59
    %899 = vmatprep.subr.mxu0 0.0
    %900 = vmatpush1.msra.mxu0 %v60
    %901 = vmatprep.subr.mxu0 0.0
    %902 = vmatpush1.msra.mxu0 0.0
    %903 = vmatprep.subr.mxu0 0.0
    %904 = vmatpush1.msra.mxu0 0.0
    %905 = vmatprep.subr.mxu0 0.0
    %906 = vmatpush1.msra.mxu0 0.0
    %907 = vmatprep.subr.mxu0 0.0
    %908 = vmatpush1.msra.mxu0 0.0
    %909 = vmatprep.subr.mxu0 0.0
    %910 = vmatpush1.msra.mxu0 0.0
    %911 = vmatprep.subr.mxu0 0.0
    %912 = vmatpush1.msra.mxu0 0.0
    %913 = vmatprep.subr.mxu0 0.0
    %914 = vmatpush1.msra.mxu0 0.0
    %915 = vmatprep.subr.mxu0 0.0
    %916 = vmatpush1.msra.mxu0 0.0
    %917 = vmatprep.subr.mxu0 0.0
    %918 = vmatpush1.msra.mxu0 0.0
    %919 = vmatprep.subr.mxu0 0.0
    %920 = vmatpush1.msra.mxu0 0.0
    %921 = vmatprep.subr.mxu0 0.0
    %922 = vmatpush1.msra.mxu0 0.0
    %923 = vmatprep.subr.mxu0 0.0
    %924 = vmatpush1.msra.mxu0 0.0
    %925 = vmatprep.subr.mxu0 0.0
    %926 = vmatpush1.msra.mxu0 0.0
    %927 = vmatprep.subr.mxu0 0.0
    %928 = vmatpush1.msra.mxu0 0.0
    %929 = vmatprep.subr.mxu0 0.0
    %930 = vmatpush1.msra.mxu0 0.0
    %931 = vmatprep.subr.mxu0 0.0
    %932 = vmatpush1.msra.mxu0 0.0
    %933 = vmatprep.subr.mxu0 0.0
    %934 = vmatpush1.msra.mxu0 0.0
    %935 = vmatprep.subr.mxu0 0.0
    %936 = vmatpush1.msra.mxu0 0.0
    %937 = vmatprep.subr.mxu0 0.0
    %938 = vmatpush1.msra.mxu0 0.0
    %939 = vmatprep.subr.mxu0 0.0
    %940 = vmatpush1.msra.mxu0 0.0
    %941 = vmatprep.subr.mxu0 0.0
    %942 = vmatpush1.msra.mxu0 0.0
    %943 = vmatprep.subr.mxu0 0.0
    %944 = vmatpush1.msra.mxu0 0.0
    %945 = vmatprep.subr.mxu0 0.0
    %946 = vmatpush1.msra.mxu0 0.0
    %947 = vmatprep.subr.mxu0 0.0
    %948 = vmatpush1.msra.mxu0 0.0
    %949 = vmatprep.subr.mxu0 0.0
    %950 = vmatpush1.msra.mxu0 0.0
    %951 = vmatprep.subr.mxu0 0.0
    %952 = vmatpush1.msra.mxu0 0.0
    %953 = vmatprep.subr.mxu0 0.0
    %954 = vmatpush1.msra.mxu0 0.0
    %955 = vmatprep.subr.mxu0 0.0
    %956 = vmatpush1.msra.mxu0 0.0
    %957 = vmatprep.mubr.f32.mxu0 0.0
    %958 = vmatmul.mubr.f32.gmra.mrb[0].mxu0 %v891
    %v959 = vpop.f32.mrb[0].mxu0
    %v960 = vadd.f32 %v889, %v959
    %v961 = vpop.f32.mrb[0].mxu0
    %962 = vdwg.mxu0
    %v964 = vrot.slane %v69, 6
    %vm966 = vcmask 1041408
    %v967 = vsel %vm966, %v960, %v964
    %v969 = vsel %vm299, %v29, 0
    %v972 = vsel %vm299, %v30, 0
    %v975 = vsel %vm326, %v967, 0
    %977 = vmatprep.subr.mxu0 0.0
    %978 = vmatpush1.msra.mxu0 %v975
    %979 = vmatprep.subr.mxu0 0.0
    %980 = vmatpush1.msra.mxu0 0.0
    %981 = vmatprep.subr.mxu0 0.0
    %982 = vmatpush1.msra.mxu0 0.0
    %983 = vmatprep.subr.mxu0 0.0
    %984 = vmatpush1.msra.mxu0 0.0
    %985 = vmatprep.subr.mxu0 0.0
    %986 = vmatpush1.msra.mxu0 0.0
    %987 = vmatprep.subr.mxu0 0.0
    %988 = vmatpush1.msra.mxu0 0.0
    %989 = vmatprep.subr.mxu0 0.0
    %990 = vmatpush1.msra.mxu0 0.0
    %991 = vmatprep.subr.mxu0 0.0
    %992 = vmatpush1.msra.mxu0 0.0
    %993 = vmatprep.subr.mxu0 0.0
    %994 = vmatpush1.msra.mxu0 0.0
    %995 = vmatprep.subr.mxu0 0.0
    %996 = vmatpush1.msra.mxu0 0.0
    %997 = vmatprep.subr.mxu0 0.0
    %998 = vmatpush1.msra.mxu0 0.0
    %999 = vmatprep.subr.mxu0 0.0
    %1000 = vmatpush1.msra.mxu0 0.0
    %1001 = vmatprep.subr.mxu0 0.0
    %1002 = vmatpush1.msra.mxu0 0.0
    %1003 = vmatprep.subr.mxu0 0.0
    %1004 = vmatpush1.msra.mxu0 0.0
    %1005 = vmatprep.subr.mxu0 0.0
    %1006 = vmatpush1.msra.mxu0 0.0
    %1007 = vmatprep.subr.mxu0 0.0
    %1008 = vmatpush1.msra.mxu0 0.0
    %1009 = vmatprep.subr.mxu0 0.0
    %1010 = vmatpush1.msra.mxu0 0.0
    %1011 = vmatprep.subr.mxu0 0.0
    %1012 = vmatpush1.msra.mxu0 0.0
    %1013 = vmatprep.subr.mxu0 0.0
    %1014 = vmatpush1.msra.mxu0 0.0
    %1015 = vmatprep.subr.mxu0 0.0
    %1016 = vmatpush1.msra.mxu0 0.0
    %1017 = vmatprep.subr.mxu0 0.0
    %1018 = vmatpush1.msra.mxu0 0.0
    %1019 = vmatprep.subr.mxu0 0.0
    %1020 = vmatpush1.msra.mxu0 0.0
    %1021 = vmatprep.subr.mxu0 0.0
    %1022 = vmatpush1.msra.mxu0 0.0
    %1023 = vmatprep.subr.mxu0 0.0
    %1024 = vmatpush1.msra.mxu0 0.0
    %1025 = vmatprep.subr.mxu0 0.0
    %1026 = vmatpush1.msra.mxu0 0.0
    %1027 = vmatprep.subr.mxu0 0.0
    %1028 = vmatpush1.msra.mxu0 0.0
    %1029 = vmatprep.subr.mxu0 0.0
    %1030 = vmatpush1.msra.mxu0 0.0
    %1031 = vmatprep.subr.mxu0 0.0
    %1032 = vmatpush1.msra.mxu0 0.0
    %1033 = vmatprep.subr.mxu0 0.0
    %1034 = vmatpush1.msra.mxu0 0.0
    %1035 = vmatprep.subr.mxu0 0.0
    %1036 = vmatpush1.msra.mxu0 0.0
    %1037 = vmatprep.subr.mxu0 0.0
    %1038 = vmatpush1.msra.mxu0 0.0
    %1039 = vmatprep.subr.mxu0 0.0
    %1040 = vmatpush1.msra.mxu0 0.0
    %1041 = vmatprep.mubr.f32.mxu0 0.0
    %1042 = vmatmul.mubr.f32.gmra.mrb[0].mxu0 %v969
    %v1043 = vpop.f32.mrb[0].mxu0
    %v1044 = vadd.f32 0.0, %v1043
    %v1045 = vpop.f32.mrb[0].mxu0
    %1046 = vmatprep.mubr.f32.mxu0 0.0
    %1047 = vmatmul.mubr.f32.gmra.mrb[0].mxu0 %v972
    %v1048 = vpop.f32.mrb[0].mxu0
    %v1049 = vadd.f32 0.0, %v1048
    %v1050 = vpop.f32.mrb[0].mxu0
    %1051 = vdwg.mxu0
    %v1052 = vmax.f32 %v1044, 0.0
    %v1053 = vmax.f32 %v1049, 0.0
    %v1054 = vlaneseq
    %v1055 = vshrl.u32 %v1054, 7
    %v1056 = vsub.s32 0, %v1055
    %v1057 = vrot.slane %v70, %v1056
    %v1059 = vsel %vm72, %v1052, 0
    %v1062 = vsel %vm72, %v1053, 0
    %1064 = vmatprep.subr.mxu0 0.0
    %1065 = vmatpush1.msra.mxu0 %v61
    %1066 = vmatprep.subr.mxu0 0.0
    %1067 = vmatpush1.msra.mxu0 %v62
    %1068 = vmatprep.subr.mxu0 0.0
    %1069 = vmatpush1.msra.mxu0 %v63
    %1070 = vmatprep.subr.mxu0 0.0
    %1071 = vmatpush1.msra.mxu0 %v64
    %1072 = vmatprep.subr.mxu0 0.0
    %1073 = vmatpush1.msra.mxu0 0.0
    %1074 = vmatprep.subr.mxu0 0.0
    %1075 = vmatpush1.msra.mxu0 0.0
    %1076 = vmatprep.subr.mxu0 0.0
    %1077 = vmatpush1.msra.mxu0 0.0
    %1078 = vmatprep.subr.mxu0 0.0
    %1079 = vmatpush1.msra.mxu0 0.0
    %1080 = vmatprep.subr.mxu0 0.0
    %1081 = vmatpush1.msra.mxu0 0.0
    %1082 = vmatprep.subr.mxu0 0.0
    %1083 = vmatpush1.msra.mxu0 0.0
    %1084 = vmatprep.subr.mxu0 0.0
    %1085 = vmatpush1.msra.mxu0 0.0
    %1086 = vmatprep.subr.mxu0 0.0
    %1087 = vmatpush1.msra.mxu0 0.0
    %1088 = vmatprep.subr.mxu0 0.0
    %1089 = vmatpush1.msra.mxu0 0.0
    %1090 = vmatprep.subr.mxu0 0.0
    %1091 = vmatpush1.msra.mxu0 0.0
    %1092 = vmatprep.subr.mxu0 0.0
    %1093 = vmatpush1.msra.mxu0 0.0
    %1094 = vmatprep.subr.mxu0 0.0
    %1095 = vmatpush1.msra.mxu0 0.0
    %1096 = vmatprep.subr.mxu0 0.0
    %1097 = vmatpush1.msra.mxu0 0.0
    %1098 = vmatprep.subr.mxu0 0.0
    %1099 = vmatpush1.msra.mxu0 0.0
    %1100 = vmatprep.subr.mxu0 0.0
    %1101 = vmatpush1.msra.mxu0 0.0
    %1102 = vmatprep.subr.mxu0 0.0
    %1103 = vmatpush1.msra.mxu0 0.0
    %1104 = vmatprep.subr.mxu0 0.0
    %1105 = vmatpush1.msra.mxu0 0.0
    %1106 = vmatprep.subr.mxu0 0.0
    %1107 = vmatpush1.msra.mxu0 0.0
    %1108 = vmatprep.subr.mxu0 0.0
    %1109 = vmatpush1.msra.mxu0 0.0
    %1110 = vmatprep.subr.mxu0 0.0
    %1111 = vmatpush1.msra.mxu0 0.0
    %1112 = vmatprep.subr.mxu0 0.0
    %1113 = vmatpush1.msra.mxu0 0.0
    %1114 = vmatprep.subr.mxu0 0.0
    %1115 = vmatpush1.msra.mxu0 0.0
    %1116 = vmatprep.subr.mxu0 0.0
    %1117 = vmatpush1.msra.mxu0 0.0
    %1118 = vmatprep.subr.mxu0 0.0
    %1119 = vmatpush1.msra.mxu0 0.0
    %1120 = vmatprep.subr.mxu0 0.0
    %1121 = vmatpush1.msra.mxu0 0.0
    %1122 = vmatprep.subr.mxu0 0.0
    %1123 = vmatpush1.msra.mxu0 0.0
    %1124 = vmatprep.subr.mxu0 0.0
    %1125 = vmatpush1.msra.mxu0 0.0
    %1126 = vmatprep.subr.mxu0 0.0
    %1127 = vmatpush1.msra.mxu0 0.0
    %1128 = vmatprep.mubr.f32.mxu0 0.0
    %1129 = vmatmul.mubr.f32.gmra.mrb[0].mxu0 %v1059
    %v1130 = vpop.f32.mrb[0].mxu0
    %v1131 = vadd.f32 %v1057, %v1130
    %v1132 = vpop.f32.mrb[0].mxu0
    %1133 = vmatprep.mubr.f32.mxu0 0.0
    %1134 = vmatmul.mubr.f32.gmra.mrb[0].mxu0 %v1062
    %v1135 = vpop.f32.mrb[0].mxu0
    %v1136 = vadd.f32 %v1057, %v1135
    %v1137 = vpop.f32.mrb[0].mxu0
    %1138 = vdwg.mxu0
    %1139 = vst [vmem:[%s2] sm:$0xff] %v1131
    %1140 = vst [vmem:[%s2 + $0x8] sm:$0xff] %v1136
    %1141 = vrot.lane.b32.xlu0 %v883, 8
    %v1142 = vpop.permute.xlu0 %1141
    %vm1144 = vcmask 320576
    %1145 = vst.msk [vmem:[%s2] sm:$0x3] %vm1144, %v1142
    // Predicated region
    $region14: #{trajectory_embedding_model.1} parent=1 // pred_check
      _
    $region15: #{trajectory_embedding_model.1} parent=1 // pred_check_branch
      %1147 = sbr.rel (0) target = $region17
    $region16: #{trajectory_embedding_model.1} parent=1 // pred_region
      _
    $region17: #{trajectory_embedding_model.1} parent=1 // pred_fallthru
      _
    // Predicated region
    $region18: #{trajectory_embedding_model.1} parent=1 // pred_check
      _
    $region19: #{trajectory_embedding_model.1} parent=1 // pred_check_branch
      %1149 = sbr.rel (0) target = $region21
    $region20: #{trajectory_embedding_model.1} parent=1 // pred_region
      _
    $region21: #{trajectory_embedding_model.1} parent=1 // pred_fallthru
      _
    %1150 = vsyncpa [#allocation3], 1

</llo_original>
